<compile_context>
chip_gen: v6e
topology: v6e:2x2x1
jax: 0.10.0
libtpu: 0.0.40
codegen_flags: <defaults>
</compile_context>

<pallas_src>
import functools

import jax
import jax.numpy as jnp
from jax.experimental import pallas as pl
from jax.experimental.pallas import tpu as pltpu


def dueling_q_kernel(
    x_ref,
    w1_ref, b1_ref,
    w2_ref, b2_ref,
    ws_ref, bs_ref,      # fused [wv1 | wa1], [bv1 | ba1]
    wh_ref, bh_ref,      # fused block-structured head (value col + adv cols, zero padded)
    q_ref,
    *,
    output_dim,
):
    x = x_ref[...]  # bf16 [TB, IN]

    # Feature layer: Linear(IN,128) -> ReLU -> Linear(128,128) -> ReLU
    h = jnp.dot(x, w1_ref[...], preferred_element_type=jnp.float32) + b1_ref[...]
    h = jnp.maximum(h, 0.0).astype(jnp.bfloat16)
    h = jnp.dot(h, w2_ref[...], preferred_element_type=jnp.float32) + b2_ref[...]
    feats = jnp.maximum(h, 0.0).astype(jnp.bfloat16)

    # Fused value/advantage first layers: Linear(128,128) -> ReLU
    # (cols 0:64 = value-stream hidden, cols 64:128 = advantage-stream hidden)
    s = jnp.dot(feats, ws_ref[...], preferred_element_type=jnp.float32) + bs_ref[...]
    s = jnp.maximum(s, 0.0).astype(jnp.bfloat16)

    # Fused head: one lane-dense matmul produces adv in cols [0:output_dim],
    # value in col output_dim, zeros elsewhere.  f32 accumulator.
    head = jnp.dot(s, wh_ref[...], preferred_element_type=jnp.float32) + bh_ref[...]

    col = jax.lax.broadcasted_iota(jnp.int32, head.shape, 1)
    adv_sum = jnp.sum(jnp.where(col < output_dim, head, 0.0), axis=1, keepdims=True)
    value = jnp.sum(jnp.where(col == output_dim, head, 0.0), axis=1, keepdims=True)
    adv_mean = adv_sum * (1.0 / float(output_dim))

    # For real action columns (col < output_dim): V + (A - mean(A)).
    # Padded columns hold junk and are sliced off in the wrapper; writing the
    # full 128-lane tile keeps the store lane-dense (unmasked vst).
    q_ref[...] = value + (head - adv_mean)


def init_linear_params(key, in_dim, out_dim):
    """PyTorch-style uniform(-1/sqrt(in), 1/sqrt(in)) init, deterministic."""
    kw, kb = jax.random.split(key)
    bound = 1.0 / jnp.sqrt(jnp.float32(in_dim))
    w = jax.random.uniform(kw, (in_dim, out_dim), jnp.float32, -bound, bound)
    b = jax.random.uniform(kb, (1, out_dim), jnp.float32, -bound, bound)
    return w, b


def pack_params(params, output_dim):
    """Fuse/pad the six Linear layers into lane-dense, bf16 MXU operands."""
    (w1, b1), (w2, b2), (wv1, bv1), (wv2, bv2), (wa1, ba1), (wa2, ba2) = params

    # Fused stream layer: [128, 64+64] -> one 128-wide matmul.
    ws = jnp.concatenate([wv1, wa1], axis=1)          # [128, 128]
    bs = jnp.concatenate([bv1, ba1], axis=1)          # [1, 128]

    # Fused, zero-padded head: adv in cols [0:output_dim] (from rows 64:128),
    # value in col output_dim (from rows 0:64), remaining columns exactly zero.
    head_n = pl.cdiv(output_dim + 1, 128) * 128
    wh = jnp.zeros((128, head_n), jnp.float32)
    wh = wh.at[64:128, :output_dim].set(wa2)
    wh = wh.at[:64, output_dim].set(wv2[:, 0])
    bh = jnp.zeros((1, head_n), jnp.float32)
    bh = bh.at[0, :output_dim].set(ba2[0])
    bh = bh.at[0, output_dim].set(bv2[0, 0])

    # Matmul inputs in bf16 (MXU-native), biases stay f32 (added to f32 acc).
    return (
        w1.astype(jnp.bfloat16), b1,
        w2.astype(jnp.bfloat16), b2,
        ws.astype(jnp.bfloat16), bs,
        wh.astype(jnp.bfloat16), bh,
    )


def dueling_q_forward(x, params, output_dim, tb=128):
    batch, input_dim = x.shape
    packed = pack_params(params, output_dim)
    head_n = packed[-1].shape[1]

    num_tiles = pl.cdiv(batch, tb)
    padded = num_tiles * tb
    if padded != batch:
        x = jnp.pad(x, ((0, padded - batch), (0, 0)))
    x = x.astype(jnp.bfloat16)

    flops = 2 * padded * (input_dim * 128 + 128 * 128 + 128 * 128 + 128 * head_n)
    bytes_accessed = (
        padded * input_dim * 2                       # bf16 activations in
        + padded * head_n * 4                        # f32 Q out
        + sum(int(p.size) * p.dtype.itemsize for p in packed)
    )

    kernel = functools.partial(dueling_q_kernel, output_dim=output_dim)

    in_specs = [pl.BlockSpec((tb, input_dim), lambda i: (i, 0))] + [
        pl.BlockSpec(p.shape, lambda i: (0, 0)) for p in packed
    ]

    q_padded = pl.pallas_call(
        kernel,
        out_shape=jax.ShapeDtypeStruct((padded, head_n), jnp.float32),
        grid=(num_tiles,),
        in_specs=in_specs,
        out_specs=pl.BlockSpec((tb, head_n), lambda i: (i, 0)),
        compiler_params=pltpu.CompilerParams(
            dimension_semantics=("parallel",),
        ),
        cost_estimate=pl.CostEstimate(
            flops=flops, transcendentals=0, bytes_accessed=bytes_accessed
        ),
    )(x, *packed)

    return q_padded[:batch, :output_dim]


def reference_forward(x, params):
    """Plain-JAX reference mirroring the kernel's bf16-in / f32-accumulate math."""

    def bq(t):  # bf16 quantize, compute in f32
        return t.astype(jnp.bfloat16).astype(jnp.float32)

    (w1, b1), (w2, b2), (wv1, bv1), (wv2, bv2), (wa1, ba1), (wa2, ba2) = params
    h = jax.nn.relu(bq(x) @ bq(w1) + b1)
    feats = jax.nn.relu(bq(h) @ bq(w2) + b2)
    v = jax.nn.relu(bq(feats) @ bq(wv1) + bv1)
    value = bq(v) @ bq(wv2) + bv2
    a = jax.nn.relu(bq(feats) @ bq(wa1) + ba1)
    adv = bq(a) @ bq(wa2) + ba2
    return value + (adv - adv.mean(axis=1, keepdims=True))


if __name__ == "__main__":
    batch = 200          # not a multiple of the 128-row tile -> exercises padding + 2-step grid
    input_dim = 16
    output_dim = 8

    key = jax.random.PRNGKey(0)
    kx, k1, k2, k3, k4, k5, k6 = jax.random.split(key, 7)

    x = jax.random.normal(kx, (batch, input_dim), jnp.float32)

    params = (
        init_linear_params(k1, input_dim, 128),   # feature_layer[0]
        init_linear_params(k2, 128, 128),         # feature_layer[2]
        init_linear_params(k3, 128, 64),          # value_stream[0]
        init_linear_params(k4, 64, 1),            # value_stream[2]
        init_linear_params(k5, 128, 64),          # advantage_stream[0]
        init_linear_params(k6, 64, output_dim),   # advantage_stream[2]
    )

    q = dueling_q_forward(x, params, output_dim)
    q = jax.block_until_ready(q)

    q_ref = reference_forward(x, params)
    assert q.shape == (batch, output_dim)
    assert jnp.allclose(q, q_ref, atol=2e-3, rtol=2e-3)

    print("KERNEL_OK")
</pallas_src>

<mosaic_0001>
module attributes {stable_mosaic.version = 11 : i64} {
  func.func @dueling_q_kernel(%arg0: i32, %arg1: memref<128x16xbf16, #tpu.memory_space<vmem>>, %arg2: memref<16x128xbf16, #tpu.memory_space<vmem>>, %arg3: memref<1x128xf32, #tpu.memory_space<vmem>>, %arg4: memref<128x128xbf16, #tpu.memory_space<vmem>>, %arg5: memref<1x128xf32, #tpu.memory_space<vmem>>, %arg6: memref<128x128xbf16, #tpu.memory_space<vmem>>, %arg7: memref<1x128xf32, #tpu.memory_space<vmem>>, %arg8: memref<128x128xbf16, #tpu.memory_space<vmem>>, %arg9: memref<1x128xf32, #tpu.memory_space<vmem>>, %arg10: memref<128x128xf32, #tpu.memory_space<vmem>>) attributes {dimension_semantics = [#tpu.dimension_semantics<parallel>], iteration_bounds = array<i64: 2>, scalar_prefetch = 0 : i64, scratch_operands = 0 : i64, tpu.core_type = #tpu.core_type<tc>, window_params = [{transform_indices = @transform_0, window_bounds = array<i64: 128, 16>}, {pipeline_mode = #tpu.pipeline_mode<synchronous>, transform_indices = @transform_1, window_bounds = array<i64: 16, 128>}, {pipeline_mode = #tpu.pipeline_mode<synchronous>, transform_indices = @transform_2, window_bounds = array<i64: 1, 128>}, {pipeline_mode = #tpu.pipeline_mode<synchronous>, transform_indices = @transform_3, window_bounds = array<i64: 128, 128>}, {pipeline_mode = #tpu.pipeline_mode<synchronous>, transform_indices = @transform_4, window_bounds = array<i64: 1, 128>}, {pipeline_mode = #tpu.pipeline_mode<synchronous>, transform_indices = @transform_5, window_bounds = array<i64: 128, 128>}, {pipeline_mode = #tpu.pipeline_mode<synchronous>, transform_indices = @transform_6, window_bounds = array<i64: 1, 128>}, {pipeline_mode = #tpu.pipeline_mode<synchronous>, transform_indices = @transform_7, window_bounds = array<i64: 128, 128>}, {pipeline_mode = #tpu.pipeline_mode<synchronous>, transform_indices = @transform_8, window_bounds = array<i64: 1, 128>}, {transform_indices = @transform_9, window_bounds = array<i64: 128, 128>}]} {
    %c0 = arith.constant 0 : index
    %c0_0 = arith.constant 0 : index
    %0 = vector.load %arg1[%c0, %c0_0] : memref<128x16xbf16, #tpu.memory_space<vmem>>, vector<128x16xbf16>
    %c0_1 = arith.constant 0 : index
    %c0_2 = arith.constant 0 : index
    %1 = vector.load %arg2[%c0_1, %c0_2] : memref<16x128xbf16, #tpu.memory_space<vmem>>, vector<16x128xbf16>
    %cst = arith.constant dense<0.000000e+00> : vector<128x128xf32>
    %2 = tpu.matmul %0, %1, %cst {dimension_numbers = #tpu.dot_dimension_numbers<[1], [0], [0], [1], [0, 0, 1, 1], [], []>} : vector<128x16xbf16>, vector<16x128xbf16>, vector<128x128xf32> -> vector<128x128xf32>
    %c0_3 = arith.constant 0 : index
    %c0_4 = arith.constant 0 : index
    %3 = vector.load %arg3[%c0_3, %c0_4] : memref<1x128xf32, #tpu.memory_space<vmem>>, vector<1x128xf32>
    %4 = vector.broadcast %3 : vector<1x128xf32> to vector<128x128xf32>
    %5 = arith.addf %2, %4 : vector<128x128xf32>
    %cst_5 = arith.constant 0.000000e+00 : f32
    %6 = vector.broadcast %cst_5 : f32 to vector<128x128xf32>
    %7 = arith.maximumf %5, %6 : vector<128x128xf32>
    %8 = arith.truncf %7 : vector<128x128xf32> to vector<128x128xbf16>
    %c0_6 = arith.constant 0 : index
    %c0_7 = arith.constant 0 : index
    %9 = vector.load %arg4[%c0_6, %c0_7] : memref<128x128xbf16, #tpu.memory_space<vmem>>, vector<128x128xbf16>
    %cst_8 = arith.constant dense<0.000000e+00> : vector<128x128xf32>
    %10 = tpu.matmul %8, %9, %cst_8 {dimension_numbers = #tpu.dot_dimension_numbers<[1], [0], [0], [1], [0, 0, 1, 1], [], []>} : vector<128x128xbf16>, vector<128x128xbf16>, vector<128x128xf32> -> vector<128x128xf32>
    %c0_9 = arith.constant 0 : index
    %c0_10 = arith.constant 0 : index
    %11 = vector.load %arg5[%c0_9, %c0_10] : memref<1x128xf32, #tpu.memory_space<vmem>>, vector<1x128xf32>
    %12 = vector.broadcast %11 : vector<1x128xf32> to vector<128x128xf32>
    %13 = arith.addf %10, %12 : vector<128x128xf32>
    %cst_11 = arith.constant 0.000000e+00 : f32
    %14 = vector.broadcast %cst_11 : f32 to vector<128x128xf32>
    %15 = arith.maximumf %13, %14 : vector<128x128xf32>
    %16 = arith.truncf %15 : vector<128x128xf32> to vector<128x128xbf16>
    %c0_12 = arith.constant 0 : index
    %c0_13 = arith.constant 0 : index
    %17 = vector.load %arg6[%c0_12, %c0_13] : memref<128x128xbf16, #tpu.memory_space<vmem>>, vector<128x128xbf16>
    %cst_14 = arith.constant dense<0.000000e+00> : vector<128x128xf32>
    %18 = tpu.matmul %16, %17, %cst_14 {dimension_numbers = #tpu.dot_dimension_numbers<[1], [0], [0], [1], [0, 0, 1, 1], [], []>} : vector<128x128xbf16>, vector<128x128xbf16>, vector<128x128xf32> -> vector<128x128xf32>
    %c0_15 = arith.constant 0 : index
    %c0_16 = arith.constant 0 : index
    %19 = vector.load %arg7[%c0_15, %c0_16] : memref<1x128xf32, #tpu.memory_space<vmem>>, vector<1x128xf32>
    %20 = vector.broadcast %19 : vector<1x128xf32> to vector<128x128xf32>
    %21 = arith.addf %18, %20 : vector<128x128xf32>
    %cst_17 = arith.constant 0.000000e+00 : f32
    %22 = vector.broadcast %cst_17 : f32 to vector<128x128xf32>
    %23 = arith.maximumf %21, %22 : vector<128x128xf32>
    %24 = arith.truncf %23 : vector<128x128xf32> to vector<128x128xbf16>
    %c0_18 = arith.constant 0 : index
    %c0_19 = arith.constant 0 : index
    %25 = vector.load %arg8[%c0_18, %c0_19] : memref<128x128xbf16, #tpu.memory_space<vmem>>, vector<128x128xbf16>
    %cst_20 = arith.constant dense<0.000000e+00> : vector<128x128xf32>
    %26 = tpu.matmul %24, %25, %cst_20 {dimension_numbers = #tpu.dot_dimension_numbers<[1], [0], [0], [1], [0, 0, 1, 1], [], []>} : vector<128x128xbf16>, vector<128x128xbf16>, vector<128x128xf32> -> vector<128x128xf32>
    %c0_21 = arith.constant 0 : index
    %c0_22 = arith.constant 0 : index
    %27 = vector.load %arg9[%c0_21, %c0_22] : memref<1x128xf32, #tpu.memory_space<vmem>>, vector<1x128xf32>
    %28 = vector.broadcast %27 : vector<1x128xf32> to vector<128x128xf32>
    %29 = arith.addf %26, %28 : vector<128x128xf32>
    %30 = tpu.iota {dimensions = array<i32: 1>} : vector<128x128xi32>
    %c8_i32 = arith.constant 8 : i32
    %31 = vector.broadcast %c8_i32 : i32 to vector<128x128xi32>
    %32 = arith.cmpi slt, %30, %31 : vector<128x128xi32>
    %cst_23 = arith.constant 0.000000e+00 : f32
    %33 = vector.broadcast %cst_23 : f32 to vector<128x128xf32>
    %34 = arith.select %32, %29, %33 : vector<128x128xi1>, vector<128x128xf32>
    %cst_24 = arith.constant dense<0.000000e+00> : vector<128xf32>
    %35 = vector.multi_reduction <add>, %34, %cst_24 [1] : vector<128x128xf32> to vector<128xf32>
    %36 = vector.shape_cast %35 : vector<128xf32> to vector<128x1xf32>
    %c8_i32_25 = arith.constant 8 : i32
    %37 = vector.broadcast %c8_i32_25 : i32 to vector<128x128xi32>
    %38 = arith.cmpi eq, %30, %37 : vector<128x128xi32>
    %cst_26 = arith.constant 0.000000e+00 : f32
    %39 = vector.broadcast %cst_26 : f32 to vector<128x128xf32>
    %40 = arith.select %38, %29, %39 : vector<128x128xi1>, vector<128x128xf32>
    %cst_27 = arith.constant dense<0.000000e+00> : vector<128xf32>
    %41 = vector.multi_reduction <add>, %40, %cst_27 [1] : vector<128x128xf32> to vector<128xf32>
    %42 = vector.shape_cast %41 : vector<128xf32> to vector<128x1xf32>
    %cst_28 = arith.constant 1.250000e-01 : f32
    %43 = vector.broadcast %cst_28 : f32 to vector<128x1xf32>
    %44 = arith.mulf %36, %43 : vector<128x1xf32>
    %45 = vector.broadcast %44 : vector<128x1xf32> to vector<128x128xf32>
    %46 = arith.subf %29, %45 : vector<128x128xf32>
    %47 = vector.broadcast %42 : vector<128x1xf32> to vector<128x128xf32>
    %48 = arith.addf %47, %46 : vector<128x128xf32>
    %c0_29 = arith.constant 0 : index
    %c0_30 = arith.constant 0 : index
    %49 = vector.load %arg10[%c0_29, %c0_30] : memref<128x128xf32, #tpu.memory_space<vmem>>, vector<128x128xf32>
    tpu.vector_store %arg10[%c0_29, %c0_30], %48 {strides = array<i32>} : memref<128x128xf32, #tpu.memory_space<vmem>>, vector<128x128xf32>,
    return
  }
  func.func @transform_0(%arg0: i32) -> (i32, i32) {
    %c0_i32 = arith.constant 0 : i32
    %c0_i32_0 = arith.constant 0 : i32
    return %arg0, %c0_i32 : i32, i32
  }
  func.func @transform_1(%arg0: i32) -> (i32, i32) {
    %c0_i32 = arith.constant 0 : i32
    %c0_i32_0 = arith.constant 0 : i32
    %c0_i32_1 = arith.constant 0 : i32
    return %c0_i32, %c0_i32_0 : i32, i32
  }
  func.func @transform_2(%arg0: i32) -> (i32, i32) {
    %c0_i32 = arith.constant 0 : i32
    %c0_i32_0 = arith.constant 0 : i32
    %c0_i32_1 = arith.constant 0 : i32
    return %c0_i32, %c0_i32_0 : i32, i32
  }
  func.func @transform_3(%arg0: i32) -> (i32, i32) {
    %c0_i32 = arith.constant 0 : i32
    %c0_i32_0 = arith.constant 0 : i32
    %c0_i32_1 = arith.constant 0 : i32
    return %c0_i32, %c0_i32_0 : i32, i32
  }
  func.func @transform_4(%arg0: i32) -> (i32, i32) {
    %c0_i32 = arith.constant 0 : i32
    %c0_i32_0 = arith.constant 0 : i32
    %c0_i32_1 = arith.constant 0 : i32
    return %c0_i32, %c0_i32_0 : i32, i32
  }
  func.func @transform_5(%arg0: i32) -> (i32, i32) {
    %c0_i32 = arith.constant 0 : i32
    %c0_i32_0 = arith.constant 0 : i32
    %c0_i32_1 = arith.constant 0 : i32
    return %c0_i32, %c0_i32_0 : i32, i32
  }
  func.func @transform_6(%arg0: i32) -> (i32, i32) {
    %c0_i32 = arith.constant 0 : i32
    %c0_i32_0 = arith.constant 0 : i32
    %c0_i32_1 = arith.constant 0 : i32
    return %c0_i32, %c0_i32_0 : i32, i32
  }
  func.func @transform_7(%arg0: i32) -> (i32, i32) {
    %c0_i32 = arith.constant 0 : i32
    %c0_i32_0 = arith.constant 0 : i32
    %c0_i32_1 = arith.constant 0 : i32
    return %c0_i32, %c0_i32_0 : i32, i32
  }
  func.func @transform_8(%arg0: i32) -> (i32, i32) {
    %c0_i32 = arith.constant 0 : i32
    %c0_i32_0 = arith.constant 0 : i32
    %c0_i32_1 = arith.constant 0 : i32
    return %c0_i32, %c0_i32_0 : i32, i32
  }
  func.func @transform_9(%arg0: i32) -> (i32, i32) {
    %c0_i32 = arith.constant 0 : i32
    %c0_i32_0 = arith.constant 0 : i32
    return %arg0, %c0_i32 : i32, i32
  }
}

</mosaic_0001>

<llo_original>
// kernel: tpu_custom_call.1
$region0: #{tpu_custom_call.1}
  #allocation0 [shape = 'u32[]', space=smem, size = 0x4, offset = 0x4, fixed_abs, tag = 'smem constant byte address 0x4 - core index']
  #allocation1 [shape = 'u32[144,128]{1,0:T(1,128)}', space=vmem, size = 0x12000, scoped, tag = 'internal scratch']
  %s0 = inlined_call_operand.vmem [shape: bf16[256,16], index: 0, kind: input, shape index: {}]
  %s1 = inlined_call_operand.vmem [shape: bf16[16,128], index: 1, kind: input, shape index: {}]
  %s2 = inlined_call_operand.vmem [shape: f32[1,128], index: 2, kind: input, shape index: {}]
  %s3 = inlined_call_operand.vmem [shape: bf16[128,128], index: 3, kind: input, shape index: {}]
  %s4 = inlined_call_operand.vmem [shape: f32[1,128], index: 4, kind: input, shape index: {}]
  %s5 = inlined_call_operand.vmem [shape: bf16[128,128], index: 5, kind: input, shape index: {}]
  %s6 = inlined_call_operand.vmem [shape: f32[1,128], index: 6, kind: input, shape index: {}]
  %s7 = inlined_call_operand.hbm [shape: bf16[128,128], index: 7, kind: input, shape index: {}]
  %s8 = inlined_call_operand.vmem [shape: f32[1,128], index: 8, kind: input, shape index: {}]
  %s9 = inlined_call_operand.hbm [shape: f32[256,128], index: 9, kind: output, shape index: {}]
  %s10 = sld [smem:[#allocation0]]
  $region73: #{tpu_custom_call.1} parent=0
    _
  %s12 = ssub.s32 1, %s10
  %s13 = scalar_select 0, %s12, %s10
  $region1: #{tpu_custom_call.1} parent=0
    #allocation2 [shape = 'u8[32768]{0}', space=vmem, size = 0x8000, scoped, tag = 'input window, operand 7, single buffered']
    #allocation3 [shape = 's32[2]{0}', space=sflag, size = 0x8, scoped, tag = 'scoped memory for tpu_custom_call.1']
    #allocation4 [shape = 's32[2]{0}', space=sflag, size = 0x8, scoped, tag = 'scoped memory for tpu_custom_call.1']
    #allocation5 [shape = 'u8[131072]{0}', space=vmem, size = 0x20000, scoped, tag = 'output window, operand 0']
    %14 = vsyncpa [#allocation3], 0
    %15 = vsyncpa [#allocation4], 0
    %s16 = scalar_lea.sflag [#allocation4], 1
    %17 = vsyncpa %s16, 0
    loop: start=0, step=1, limit=4
    $region2: #{tpu_custom_call.1} parent=1 // loop_pre_header
      _
    $region3: #{tpu_custom_call.1} parent=1 // loop_header
      %s19 = sphi 0, %s23
      %p20 = scmp.ge.s32.totalorder %s19, 4
      %s29 = sphi 0, %s31
      %s32 = sphi 0, %s29
      %s33 = sphi 0, %s32
      %s49 = sphi 0, %s33
      %s53 = sphi 0, %s53
      %s55 = sphi 0, %s53
      %s56 = sphi 0, %s55
      %s70 = sphi 0, %s56
      %s74 = sphi 0, %s74
      %s76 = sphi 0, %s74
      %s77 = sphi 0, %s76
      %s91 = sphi 0, %s77
      %s95 = sphi 0, %s95
      %s97 = sphi 0, %s95
      %s98 = sphi 0, %s97
      %s112 = sphi 0, %s98
      %s116 = sphi 0, %s116
      %s118 = sphi 0, %s116
      %s119 = sphi 0, %s118
      %s133 = sphi 0, %s119
      %s137 = sphi 0, %s137
      %s139 = sphi 0, %s137
      %s140 = sphi 0, %s139
      %s154 = sphi 0, %s140
      %s158 = sphi 0, %s158
      %s160 = sphi 0, %s158
      %s161 = sphi 0, %s160
      %s175 = sphi 0, %s161
      %s179 = sphi 0, %s179
      %s181 = sphi 0, %s179
      %s182 = sphi 0, %s181
      %s196 = sphi 0, %s182
      %s200 = sphi 0, %s200
      %s202 = sphi 0, %s200
      %s203 = sphi 0, %s202
      %s217 = sphi 0, %s203
      %s223 = sphi 0, %s225
      %s226 = sphi 0, %s223
      %s227 = sphi 0, %s226
      %s243 = sphi 0, %s227
    $region4: #{tpu_custom_call.1} parent=1 // loop_header_branch
      %22 = sbr.rel (%p20) target = $region8
    $region5: #{tpu_custom_call.1} parent=1 // loop_body
      %s24 = ssub.s32 %s19, 1
      %s25 = ssub.s32 %s19, 2
      %s26 = sadd.s32 %s19, 1
      %s27 = ssub.s32 %s19, %s26
      %p28 = scmp.eq.s32.totalorder %s27, 0
      %s30 = sadd.s32 %s29, 1
      %s31 = scalar_select %p28, %s29, %s30
      %p34 = pneg %p28
      %p35 = scmp.eq.s32.totalorder %s19, 1
      %p36 = por %p34, %p35
      %p37 = scmp.ne.s32.totalorder %s29, %s32
      %p38 = scmp.eq.s32.totalorder %s19, 0
      %p39 = por %p37, %p38
      %p40 = scmp.ne.s32.totalorder %s29, %s32
      %p41 = scmp.eq.s32.totalorder %s24, 1
      %p42 = por %p40, %p41
      %p43 = scmp.ne.s32.totalorder %s32, %s33
      %p44 = scmp.eq.s32.totalorder %s24, 0
      %p45 = por %p43, %p44
      %p46 = scmp.ne.s32.totalorder %s32, %s33
      %p47 = scmp.eq.s32.totalorder %s25, 1
      %p48 = por %p46, %p47
      %p50 = scmp.ne.s32.totalorder %s33, %s49
      %p51 = scmp.eq.s32.totalorder %s25, 0
      %p52 = por %p50, %p51
      %s54 = sadd.s32 %s53, 1
      %p57 = scmp.eq.s32.totalorder %s19, 1
      %p58 = scmp.ne.s32.totalorder %s53, %s55
      %p59 = scmp.eq.s32.totalorder %s19, 0
      %p60 = por %p58, %p59
      %p61 = scmp.ne.s32.totalorder %s53, %s55
      %p62 = scmp.eq.s32.totalorder %s24, 1
      %p63 = por %p61, %p62
      %p64 = scmp.ne.s32.totalorder %s55, %s56
      %p65 = scmp.eq.s32.totalorder %s24, 0
      %p66 = por %p64, %p65
      %p67 = scmp.ne.s32.totalorder %s55, %s56
      %p68 = scmp.eq.s32.totalorder %s25, 1
      %p69 = por %p67, %p68
      %p71 = scmp.ne.s32.totalorder %s56, %s70
      %p72 = scmp.eq.s32.totalorder %s25, 0
      %p73 = por %p71, %p72
      %s75 = sadd.s32 %s74, 1
      %p78 = scmp.eq.s32.totalorder %s19, 1
      %p79 = scmp.ne.s32.totalorder %s74, %s76
      %p80 = scmp.eq.s32.totalorder %s19, 0
      %p81 = por %p79, %p80
      %p82 = scmp.ne.s32.totalorder %s74, %s76
      %p83 = scmp.eq.s32.totalorder %s24, 1
      %p84 = por %p82, %p83
      %p85 = scmp.ne.s32.totalorder %s76, %s77
      %p86 = scmp.eq.s32.totalorder %s24, 0
      %p87 = por %p85, %p86
      %p88 = scmp.ne.s32.totalorder %s76, %s77
      %p89 = scmp.eq.s32.totalorder %s25, 1
      %p90 = por %p88, %p89
      %p92 = scmp.ne.s32.totalorder %s77, %s91
      %p93 = scmp.eq.s32.totalorder %s25, 0
      %p94 = por %p92, %p93
      %s96 = sadd.s32 %s95, 1
      %p99 = scmp.eq.s32.totalorder %s19, 1
      %p100 = scmp.ne.s32.totalorder %s95, %s97
      %p101 = scmp.eq.s32.totalorder %s19, 0
      %p102 = por %p100, %p101
      %p103 = scmp.ne.s32.totalorder %s95, %s97
      %p104 = scmp.eq.s32.totalorder %s24, 1
      %p105 = por %p103, %p104
      %p106 = scmp.ne.s32.totalorder %s97, %s98
      %p107 = scmp.eq.s32.totalorder %s24, 0
      %p108 = por %p106, %p107
      %p109 = scmp.ne.s32.totalorder %s97, %s98
      %p110 = scmp.eq.s32.totalorder %s25, 1
      %p111 = por %p109, %p110
      %p113 = scmp.ne.s32.totalorder %s98, %s112
      %p114 = scmp.eq.s32.totalorder %s25, 0
      %p115 = por %p113, %p114
      %s117 = sadd.s32 %s116, 1
      %p120 = scmp.eq.s32.totalorder %s19, 1
      %p121 = scmp.ne.s32.totalorder %s116, %s118
      %p122 = scmp.eq.s32.totalorder %s19, 0
      %p123 = por %p121, %p122
      %p124 = scmp.ne.s32.totalorder %s116, %s118
      %p125 = scmp.eq.s32.totalorder %s24, 1
      %p126 = por %p124, %p125
      %p127 = scmp.ne.s32.totalorder %s118, %s119
      %p128 = scmp.eq.s32.totalorder %s24, 0
      %p129 = por %p127, %p128
      %p130 = scmp.ne.s32.totalorder %s118, %s119
      %p131 = scmp.eq.s32.totalorder %s25, 1
      %p132 = por %p130, %p131
      %p134 = scmp.ne.s32.totalorder %s119, %s133
      %p135 = scmp.eq.s32.totalorder %s25, 0
      %p136 = por %p134, %p135
      %s138 = sadd.s32 %s137, 1
      %p141 = scmp.eq.s32.totalorder %s19, 1
      %p142 = scmp.ne.s32.totalorder %s137, %s139
      %p143 = scmp.eq.s32.totalorder %s19, 0
      %p144 = por %p142, %p143
      %p145 = scmp.ne.s32.totalorder %s137, %s139
      %p146 = scmp.eq.s32.totalorder %s24, 1
      %p147 = por %p145, %p146
      %p148 = scmp.ne.s32.totalorder %s139, %s140
      %p149 = scmp.eq.s32.totalorder %s24, 0
      %p150 = por %p148, %p149
      %p151 = scmp.ne.s32.totalorder %s139, %s140
      %p152 = scmp.eq.s32.totalorder %s25, 1
      %p153 = por %p151, %p152
      %p155 = scmp.ne.s32.totalorder %s140, %s154
      %p156 = scmp.eq.s32.totalorder %s25, 0
      %p157 = por %p155, %p156
      %s159 = sadd.s32 %s158, 1
      %p162 = scmp.eq.s32.totalorder %s19, 1
      %p163 = scmp.ne.s32.totalorder %s158, %s160
      %p164 = scmp.eq.s32.totalorder %s19, 0
      %p165 = por %p163, %p164
      %p166 = scmp.ne.s32.totalorder %s158, %s160
      %p167 = scmp.eq.s32.totalorder %s24, 1
      %p168 = por %p166, %p167
      %p169 = scmp.ne.s32.totalorder %s160, %s161
      %p170 = scmp.eq.s32.totalorder %s24, 0
      %p171 = por %p169, %p170
      %p172 = scmp.ne.s32.totalorder %s160, %s161
      %p173 = scmp.eq.s32.totalorder %s25, 1
      %p174 = por %p172, %p173
      %p176 = scmp.ne.s32.totalorder %s161, %s175
      %p177 = scmp.eq.s32.totalorder %s25, 0
      %p178 = por %p176, %p177
      %s180 = sadd.s32 %s179, 1
      %p183 = scmp.eq.s32.totalorder %s19, 1
      %p184 = scmp.ne.s32.totalorder %s179, %s181
      %p185 = scmp.eq.s32.totalorder %s19, 0
      %p186 = por %p184, %p185
      %p187 = scmp.ne.s32.totalorder %s179, %s181
      %p188 = scmp.eq.s32.totalorder %s24, 1
      %p189 = por %p187, %p188
      %p190 = scmp.ne.s32.totalorder %s181, %s182
      %p191 = scmp.eq.s32.totalorder %s24, 0
      %p192 = por %p190, %p191
      %p193 = scmp.ne.s32.totalorder %s181, %s182
      %p194 = scmp.eq.s32.totalorder %s25, 1
      %p195 = por %p193, %p194
      %p197 = scmp.ne.s32.totalorder %s182, %s196
      %p198 = scmp.eq.s32.totalorder %s25, 0
      %p199 = por %p197, %p198
      %s201 = sadd.s32 %s200, 1
      %p204 = scmp.eq.s32.totalorder %s19, 1
      %p205 = scmp.ne.s32.totalorder %s200, %s202
      %p206 = scmp.eq.s32.totalorder %s19, 0
      %p207 = por %p205, %p206
      %p208 = scmp.ne.s32.totalorder %s200, %s202
      %p209 = scmp.eq.s32.totalorder %s24, 1
      %p210 = por %p208, %p209
      %p211 = scmp.ne.s32.totalorder %s202, %s203
      %p212 = scmp.eq.s32.totalorder %s24, 0
      %p213 = por %p211, %p212
      %p214 = scmp.ne.s32.totalorder %s202, %s203
      %p215 = scmp.eq.s32.totalorder %s25, 1
      %p216 = por %p214, %p215
      %p218 = scmp.ne.s32.totalorder %s203, %s217
      %p219 = scmp.eq.s32.totalorder %s25, 0
      %p220 = por %p218, %p219
      %s221 = ssub.s32 %s19, %s26
      %p222 = scmp.eq.s32.totalorder %s221, 0
      %s224 = sadd.s32 %s223, 1
      %s225 = scalar_select %p222, %s223, %s224
      %p228 = pneg %p222
      %p229 = scmp.eq.s32.totalorder %s19, 1
      %p230 = por %p228, %p229
      %p231 = scmp.ne.s32.totalorder %s223, %s226
      %p232 = scmp.eq.s32.totalorder %s19, 0
      %p233 = por %p231, %p232
      %p234 = scmp.ne.s32.totalorder %s223, %s226
      %p235 = scmp.eq.s32.totalorder %s24, 1
      %p236 = por %p234, %p235
      %p237 = scmp.ne.s32.totalorder %s226, %s227
      %p238 = scmp.eq.s32.totalorder %s24, 0
      %p239 = por %p237, %p238
      %p240 = scmp.ne.s32.totalorder %s226, %s227
      %p241 = scmp.eq.s32.totalorder %s25, 1
      %p242 = por %p240, %p241
      %p244 = scmp.ne.s32.totalorder %s227, %s243
      %p245 = scmp.eq.s32.totalorder %s25, 0
      %p246 = por %p244, %p245
      %p247 = scmp.le.s32.totalorder 1, %s19
      %p248 = scmp.lt.s32.totalorder %s19, 3
      %p249 = pnand %p247, %p248
      %p250 = pneg %p249
      // Predicated region
      $region9: #{tpu_custom_call.1} parent=5 // pred_check
        _
      $region10: #{tpu_custom_call.1} parent=5 // pred_check_branch
        %252 = sbr.rel (%p249) target = $region12
      $region11: #{tpu_custom_call.1} parent=5 // pred_region
        %s253 = ssub.s32 %s19, 1
        // Predicated region
        $region13: #{tpu_custom_call.1} parent=11 // pred_check
          %p254 = pneg %p66
        $region14: #{tpu_custom_call.1} parent=11 // pred_check_branch
          %256 = sbr.rel (%p254) target = $region16
        $region15: #{tpu_custom_call.1} parent=11 // pred_region
          _
        $region16: #{tpu_custom_call.1} parent=11 // pred_fallthru
          _
        // Predicated region
        $region17: #{tpu_custom_call.1} parent=11 // pred_check
          %p257 = pneg %p87
        $region18: #{tpu_custom_call.1} parent=11 // pred_check_branch
          %259 = sbr.rel (%p257) target = $region20
        $region19: #{tpu_custom_call.1} parent=11 // pred_region
          _
        $region20: #{tpu_custom_call.1} parent=11 // pred_fallthru
          _
        // Predicated region
        $region21: #{tpu_custom_call.1} parent=11 // pred_check
          %p260 = pneg %p108
        $region22: #{tpu_custom_call.1} parent=11 // pred_check_branch
          %262 = sbr.rel (%p260) target = $region24
        $region23: #{tpu_custom_call.1} parent=11 // pred_region
          _
        $region24: #{tpu_custom_call.1} parent=11 // pred_fallthru
          _
        // Predicated region
        $region25: #{tpu_custom_call.1} parent=11 // pred_check
          %p263 = pneg %p129
        $region26: #{tpu_custom_call.1} parent=11 // pred_check_branch
          %265 = sbr.rel (%p263) target = $region28
        $region27: #{tpu_custom_call.1} parent=11 // pred_region
          _
        $region28: #{tpu_custom_call.1} parent=11 // pred_fallthru
          _
        // Predicated region
        $region29: #{tpu_custom_call.1} parent=11 // pred_check
          %p266 = pneg %p150
        $region30: #{tpu_custom_call.1} parent=11 // pred_check_branch
          %268 = sbr.rel (%p266) target = $region32
        $region31: #{tpu_custom_call.1} parent=11 // pred_region
          _
        $region32: #{tpu_custom_call.1} parent=11 // pred_fallthru
          _
        // Predicated region
        $region33: #{tpu_custom_call.1} parent=11 // pred_check
          %p269 = pneg %p171
        $region34: #{tpu_custom_call.1} parent=11 // pred_check_branch
          %271 = sbr.rel (%p269) target = $region36
        $region35: #{tpu_custom_call.1} parent=11 // pred_region
          _
        $region36: #{tpu_custom_call.1} parent=11 // pred_fallthru
          _
        // Predicated region
        $region37: #{tpu_custom_call.1} parent=11 // pred_check
          %p272 = pneg %p192
        $region38: #{tpu_custom_call.1} parent=11 // pred_check_branch
          %274 = sbr.rel (%p272) target = $region40
        $region39: #{tpu_custom_call.1} parent=11 // pred_region
          %s276 = ssub.s32 1024, 1024
          %277 = vsyncadd [#allocation3], %s276
          %s278 = sshll.u32 [#allocation2], 4
          %s279 = int_to_ptr.vmem [resolvable:$true] %s278
          %284 = dma.hbm_to_vmem [thread:$0]  %s7, 1024, %s279, [#allocation3], 64, 64, 4
        $region40: #{tpu_custom_call.1} parent=11 // pred_fallthru
          _
        // Predicated region
        $region41: #{tpu_custom_call.1} parent=11 // pred_check
          %p285 = pneg %p213
        $region42: #{tpu_custom_call.1} parent=11 // pred_check_branch
          %287 = sbr.rel (%p285) target = $region44
        $region43: #{tpu_custom_call.1} parent=11 // pred_region
          _
        $region44: #{tpu_custom_call.1} parent=11 // pred_fallthru
          _
      $region12: #{tpu_custom_call.1} parent=5 // pred_fallthru
        _
      %p288 = scmp.lt.s32.totalorder %s19, 2
      // Predicated region
      $region45: #{tpu_custom_call.1} parent=5 // pred_check
        %p289 = pneg %p288
      $region46: #{tpu_custom_call.1} parent=5 // pred_check_branch
        %291 = sbr.rel (%p289) target = $region48
      $region47: #{tpu_custom_call.1} parent=5 // pred_region
        // Predicated region
        $region49: #{tpu_custom_call.1} parent=47 // pred_check
          %p292 = pneg %p39
        $region50: #{tpu_custom_call.1} parent=47 // pred_check_branch
          %294 = sbr.rel (%p292) target = $region52
        $region51: #{tpu_custom_call.1} parent=47 // pred_region
          %s295 = smul.u32 16, %s19
          %p296 = scmp.lt.s32.totalorder %s295, 31
          %s297 = scalar_select %p296, %s295, 31
          %s298 = smul.addr %s297, 4
          %s299 = scalar_lea.vmem %s0, %s298
          %s300 = smul.u32 16, %s19
        $region52: #{tpu_custom_call.1} parent=47 // pred_fallthru
          _
      $region48: #{tpu_custom_call.1} parent=5 // pred_fallthru
        _
      %p301 = scmp.le.s32.totalorder 1, %s19
      %p302 = scmp.lt.s32.totalorder %s19, 3
      %p303 = pnand %p301, %p302
      %p304 = pneg %p303
      // Predicated region
      $region53: #{tpu_custom_call.1} parent=5 // pred_check
        _
      $region54: #{tpu_custom_call.1} parent=5 // pred_check_branch
        %306 = sbr.rel (%p303) target = $region56
      $region55: #{tpu_custom_call.1} parent=5 // pred_region
        %s307 = ssub.s32 %s19, 1
        // Predicated region
        $region57: #{tpu_custom_call.1} parent=55 // pred_check
          %p308 = pneg %p192
        $region58: #{tpu_custom_call.1} parent=55 // pred_check_branch
          %310 = sbr.rel (%p308) target = $region60
        $region59: #{tpu_custom_call.1} parent=55 // pred_region
          %311 = dma.done [#allocation3], 1024
        $region60: #{tpu_custom_call.1} parent=55 // pred_fallthru
          _
        %s312 = smul.u32 16, %s24
        %p313 = scmp.lt.s32.totalorder %s312, 31
        %s314 = scalar_select %p313, %s312, 31
        %s315 = smul.addr %s314, 4
        %s316 = scalar_lea.vmem %s0, %s315
        %p317 = pneg %p45
        %p318 = pneg %p42
        %p319 = pneg %p66
        %p320 = pneg %p63
        %p321 = pneg %p87
        %p322 = pneg %p84
        %p323 = pneg %p108
        %p324 = pneg %p105
        %p325 = pneg %p129
        %p326 = pneg %p126
        %p327 = pneg %p150
        %p328 = pneg %p147
        %p329 = pneg %p171
        %p330 = pneg %p168
        %p331 = pneg %p192
        %p332 = pneg %p189
        %p333 = pneg %p213
        %p334 = pneg %p210
        %p335 = pneg %p239
        %p336 = pneg %p236
        %s337 = sand.u32 %s226, 1
        %s338 = scalar_lea.sflag [#allocation4], %s337
        %s339 = sand.u32 %s226, 1
        %s340 = smul.addr %s339, 128
        %s341 = scalar_lea.vmem [#allocation5], %s340
        %s342 = smul.u32 16, %s24
        %p343 = scmp.lt.s32.totalorder %s342, 31
        %s344 = scalar_select %p343, %s342, 31
        %s345 = smul.addr %s344, 4
        %s346 = scalar_lea.vmem %s0, %s345
        %s347 = smul.u32 16, %s24
        %s348 = smul.u32 16, %s24
        %v350 = vld [vmem:[%s346] sm:$0xf]
        %v351 = vld [vmem:[%s346 + $0x4] sm:$0xf]
        %v352 = vld [vmem:[%s346 + $0x8] sm:$0xf]
        %v353 = vld [vmem:[%s346 + $0xc] sm:$0xf]
        %v354 = vld [vmem:[%s346 + $0x10] sm:$0xf]
        %v355 = vld [vmem:[%s346 + $0x14] sm:$0xf]
        %v356 = vld [vmem:[%s346 + $0x18] sm:$0xf]
        %v357 = vld [vmem:[%s346 + $0x1c] sm:$0xf]
        %v358 = vld [vmem:[%s346 + $0x20] sm:$0xf]
        %v359 = vld [vmem:[%s346 + $0x24] sm:$0xf]
        %v360 = vld [vmem:[%s346 + $0x28] sm:$0xf]
        %v361 = vld [vmem:[%s346 + $0x2c] sm:$0xf]
        %v362 = vld [vmem:[%s346 + $0x30] sm:$0xf]
        %v363 = vld [vmem:[%s346 + $0x34] sm:$0xf]
        %v364 = vld [vmem:[%s346 + $0x38] sm:$0xf]
        %v365 = vld [vmem:[%s346 + $0x3c] sm:$0xf]
        %v366 = vld [vmem:[%s1] sm:$0xf]
        %v367 = vld [vmem:[%s1 + $0x4] sm:$0xf]
        %v368 = vld [vmem:[%s2] sm:$0x1]
        %v370 = vlaneseq
        %v371 = vshrl.u32 %v370, 7
        %v372 = vsub.s32 0, %v371
        %v373 = vrot.slane %v368, %v372
        %v391 = vunpack.c.l.b16 %v350
        %v392 = vunpack.c.l.b16 %v351
        %v393 = vunpack.c.l.b16 %v352
        %v394 = vunpack.c.l.b16 %v353
        %v395 = vunpack.c.l.b16 %v354
        %v396 = vunpack.c.l.b16 %v355
        %v397 = vunpack.c.l.b16 %v356
        %v398 = vunpack.c.l.b16 %v357
        %v399 = vunpack.c.l.b16 %v358
        %v400 = vunpack.c.l.b16 %v359
        %v401 = vunpack.c.l.b16 %v360
        %v402 = vunpack.c.l.b16 %v361
        %v403 = vunpack.c.l.b16 %v362
        %v404 = vunpack.c.l.b16 %v363
        %v405 = vunpack.c.l.b16 %v364
        %v406 = vunpack.c.l.b16 %v365
        %v407 = vpack.c.b16 %v392, %v391
        %v408 = vpack.c.b16 %v394, %v393
        %v409 = vpack.c.b16 %v396, %v395
        %v410 = vpack.c.b16 %v398, %v397
        %v411 = vpack.c.b16 %v400, %v399
        %v412 = vpack.c.b16 %v402, %v401
        %v413 = vpack.c.b16 %v404, %v403
        %v414 = vpack.c.b16 %v406, %v405
        %v417 = vunpack.c.l.b16 %v366
        %v418 = vunpack.c.l.b16 %v367
        %v419 = vpack.c.b16 %v418, %v417
        %vm421 = vcmask 130048
        %v423 = vsel %vm421, %v407, 0
        %v426 = vsel %vm421, %v408, 0
        %v429 = vsel %vm421, %v409, 0
        %v432 = vsel %vm421, %v410, 0
        %v435 = vsel %vm421, %v411, 0
        %v438 = vsel %vm421, %v412, 0
        %v441 = vsel %vm421, %v413, 0
        %v444 = vsel %vm421, %v414, 0
        %446 = vmatprep.subr.bf16.mxu0 0
        %447 = vmatpush1.bf16.msra.mxu0 0
        %448 = vmatprep.subr.bf16.mxu0 0
        %449 = vmatpush1.bf16.msra.mxu0 0
        %450 = vmatprep.subr.bf16.mxu0 0
        %451 = vmatpush1.bf16.msra.mxu0 0
        %452 = vmatprep.subr.bf16.mxu0 0
        %453 = vmatpush1.bf16.msra.mxu0 0
        %454 = vmatprep.subr.bf16.mxu0 0
        %455 = vmatpush1.bf16.msra.mxu0 0
        %456 = vmatprep.subr.bf16.mxu0 0
        %457 = vmatpush1.bf16.msra.mxu0 0
        %458 = vmatprep.subr.bf16.mxu0 0
        %459 = vmatpush1.bf16.msra.mxu0 0
        %460 = vmatprep.subr.bf16.mxu0 0
        %461 = vmatpush1.bf16.msra.mxu0 %v419
        %462 = vmatprep.subr.bf16.mxu0 0
        %463 = vmatpush2.bf16.msra.mxu0 0
        %464 = vmatprep.subr.bf16.mxu0 0
        %465 = vmatpush2.bf16.msra.mxu0 0
        %466 = vmatprep.subr.bf16.mxu0 0
        %467 = vmatpush2.bf16.msra.mxu0 0
        %468 = vmatprep.subr.bf16.mxu0 0
        %469 = vmatpush2.bf16.msra.mxu0 0
        %470 = vmatprep.subr.bf16.mxu0 0
        %471 = vmatpush2.bf16.msra.mxu0 0
        %472 = vmatprep.subr.bf16.mxu0 0
        %473 = vmatpush2.bf16.msra.mxu0 0
        %474 = vmatprep.subr.bf16.mxu0 0
        %475 = vmatpush2.bf16.msra.mxu0 0
        %476 = vmatprep.subr.bf16.mxu0 0
        %477 = vmatpush2.bf16.msra.mxu0 0
        %478 = vmatprep.mubr.bf16.mxu0 0
        %479 = vmatmul.mubr.bf16.gmra.mxu0 %v423
        %v480 = vpop.f32.mrf.mxu0
        %v481 = vadd.f32 %v373, %v480
        %v482 = vpop.f32.mrf.mxu0
        %v483 = vpop.f32.mrf.mxu0
        %v484 = vadd.f32 %v373, %v483
        %v485 = vpop.f32.mrf.mxu0
        %486 = vmatprep.mubr.bf16.mxu0 0
        %487 = vmatmul.mubr.bf16.gmra.mxu0 %v426
        %v488 = vpop.f32.mrf.mxu0
        %v489 = vadd.f32 %v373, %v488
        %v490 = vpop.f32.mrf.mxu0
        %v491 = vpop.f32.mrf.mxu0
        %v492 = vadd.f32 %v373, %v491
        %v493 = vpop.f32.mrf.mxu0
        %494 = vmatprep.mubr.bf16.mxu0 0
        %495 = vmatmul.mubr.bf16.gmra.mxu0 %v429
        %v496 = vpop.f32.mrf.mxu0
        %v497 = vadd.f32 %v373, %v496
        %v498 = vpop.f32.mrf.mxu0
        %v499 = vpop.f32.mrf.mxu0
        %v500 = vadd.f32 %v373, %v499
        %v501 = vpop.f32.mrf.mxu0
        %502 = vmatprep.mubr.bf16.mxu0 0
        %503 = vmatmul.mubr.bf16.gmra.mxu0 %v432
        %v504 = vpop.f32.mrf.mxu0
        %v505 = vadd.f32 %v373, %v504
        %v506 = vpop.f32.mrf.mxu0
        %v507 = vpop.f32.mrf.mxu0
        %v508 = vadd.f32 %v373, %v507
        %v509 = vpop.f32.mrf.mxu0
        %510 = vmatprep.mubr.bf16.mxu0 0
        %511 = vmatmul.mubr.bf16.gmra.mxu0 %v435
        %v512 = vpop.f32.mrf.mxu0
        %v513 = vadd.f32 %v373, %v512
        %v514 = vpop.f32.mrf.mxu0
        %v515 = vpop.f32.mrf.mxu0
        %v516 = vadd.f32 %v373, %v515
        %v517 = vpop.f32.mrf.mxu0
        %518 = vmatprep.mubr.bf16.mxu0 0
        %519 = vmatmul.mubr.bf16.gmra.mxu0 %v438
        %v520 = vpop.f32.mrf.mxu0
        %v521 = vadd.f32 %v373, %v520
        %v522 = vpop.f32.mrf.mxu0
        %v523 = vpop.f32.mrf.mxu0
        %v524 = vadd.f32 %v373, %v523
        %v525 = vpop.f32.mrf.mxu0
        %526 = vmatprep.mubr.bf16.mxu0 0
        %527 = vmatmul.mubr.bf16.gmra.mxu0 %v441
        %v528 = vpop.f32.mrf.mxu0
        %v529 = vadd.f32 %v373, %v528
        %v530 = vpop.f32.mrf.mxu0
        %v531 = vpop.f32.mrf.mxu0
        %v532 = vadd.f32 %v373, %v531
        %v533 = vpop.f32.mrf.mxu0
        %534 = vmatprep.mubr.bf16.mxu0 0
        %535 = vmatmul.mubr.bf16.gmra.mxu0 %v444
        %v536 = vpop.f32.mrf.mxu0
        %v537 = vadd.f32 %v373, %v536
        %v538 = vpop.f32.mrf.mxu0
        %v539 = vpop.f32.mrf.mxu0
        %v540 = vadd.f32 %v373, %v539
        %v541 = vpop.f32.mrf.mxu0
        %542 = vdwg.mxu0
        %v543 = vmax.f32 %v481, 0.0
        %v544 = vmax.f32 %v484, 0.0
        %v545 = vmax.f32 %v489, 0.0
        %v546 = vmax.f32 %v492, 0.0
        %v547 = vmax.f32 %v497, 0.0
        %v548 = vmax.f32 %v500, 0.0
        %v549 = vmax.f32 %v505, 0.0
        %v550 = vmax.f32 %v508, 0.0
        %v551 = vmax.f32 %v513, 0.0
        %v552 = vmax.f32 %v516, 0.0
        %v553 = vmax.f32 %v521, 0.0
        %v554 = vmax.f32 %v524, 0.0
        %v555 = vmax.f32 %v529, 0.0
        %v556 = vmax.f32 %v532, 0.0
        %v557 = vmax.f32 %v537, 0.0
        %v558 = vmax.f32 %v540, 0.0
        %v559 = vpack.c.bf16 %v544, %v543
        %v560 = vpack.c.bf16 %v546, %v545
        %v561 = vpack.c.bf16 %v548, %v547
        %v562 = vpack.c.bf16 %v550, %v549
        %v563 = vpack.c.bf16 %v552, %v551
        %v564 = vpack.c.bf16 %v554, %v553
        %v565 = vpack.c.bf16 %v556, %v555
        %v566 = vpack.c.bf16 %v558, %v557
        %v567 = vld [vmem:[%s3] sm:$0xf]
        %v568 = vld [vmem:[%s3 + $0x4] sm:$0xf]
        %v569 = vld [vmem:[%s3 + $0x8] sm:$0xf]
        %v570 = vld [vmem:[%s3 + $0xc] sm:$0xf]
        %v571 = vld [vmem:[%s3 + $0x10] sm:$0xf]
        %v572 = vld [vmem:[%s3 + $0x14] sm:$0xf]
        %v573 = vld [vmem:[%s3 + $0x18] sm:$0xf]
        %v574 = vld [vmem:[%s3 + $0x1c] sm:$0xf]
        %v575 = vld [vmem:[%s3 + $0x20] sm:$0xf]
        %v576 = vld [vmem:[%s3 + $0x24] sm:$0xf]
        %v577 = vld [vmem:[%s3 + $0x28] sm:$0xf]
        %v578 = vld [vmem:[%s3 + $0x2c] sm:$0xf]
        %v579 = vld [vmem:[%s3 + $0x30] sm:$0xf]
        %v580 = vld [vmem:[%s3 + $0x34] sm:$0xf]
        %v581 = vld [vmem:[%s3 + $0x38] sm:$0xf]
        %v582 = vld [vmem:[%s3 + $0x3c] sm:$0xf]
        %v583 = vld [vmem:[%s4] sm:$0x1]
        %v585 = vlaneseq
        %v586 = vshrl.u32 %v585, 7
        %v587 = vsub.s32 0, %v586
        %v588 = vrot.slane %v583, %v587
        %v606 = vunpack.c.l.b16 %v567
        %v607 = vunpack.c.l.b16 %v568
        %v608 = vunpack.c.l.b16 %v569
        %v609 = vunpack.c.l.b16 %v570
        %v610 = vunpack.c.l.b16 %v571
        %v611 = vunpack.c.l.b16 %v572
        %v612 = vunpack.c.l.b16 %v573
        %v613 = vunpack.c.l.b16 %v574
        %v614 = vunpack.c.l.b16 %v575
        %v615 = vunpack.c.l.b16 %v576
        %v616 = vunpack.c.l.b16 %v577
        %v617 = vunpack.c.l.b16 %v578
        %v618 = vunpack.c.l.b16 %v579
        %v619 = vunpack.c.l.b16 %v580
        %v620 = vunpack.c.l.b16 %v581
        %v621 = vunpack.c.l.b16 %v582
        %v622 = vpack.c.b16 %v607, %v606
        %v623 = vpack.c.b16 %v609, %v608
        %v624 = vpack.c.b16 %v611, %v610
        %v625 = vpack.c.b16 %v613, %v612
        %v626 = vpack.c.b16 %v615, %v614
        %v627 = vpack.c.b16 %v617, %v616
        %v628 = vpack.c.b16 %v619, %v618
        %v629 = vpack.c.b16 %v621, %v620
        %638 = vmatprep.subr.bf16.mxu0 0
        %639 = vmatpush1.bf16.msra.mxu0 %v629
        %640 = vmatprep.subr.bf16.mxu0 0
        %641 = vmatpush1.bf16.msra.mxu0 %v628
        %642 = vmatprep.subr.bf16.mxu0 0
        %643 = vmatpush1.bf16.msra.mxu0 %v627
        %644 = vmatprep.subr.bf16.mxu0 0
        %645 = vmatpush1.bf16.msra.mxu0 %v626
        %646 = vmatprep.subr.bf16.mxu0 0
        %647 = vmatpush1.bf16.msra.mxu0 %v625
        %648 = vmatprep.subr.bf16.mxu0 0
        %649 = vmatpush1.bf16.msra.mxu0 %v624
        %650 = vmatprep.subr.bf16.mxu0 0
        %651 = vmatpush1.bf16.msra.mxu0 %v623
        %652 = vmatprep.subr.bf16.mxu0 0
        %653 = vmatpush1.bf16.msra.mxu0 %v622
        %654 = vmatprep.subr.bf16.mxu0 0
        %655 = vmatpush2.bf16.msra.mxu0 0
        %656 = vmatprep.subr.bf16.mxu0 0
        %657 = vmatpush2.bf16.msra.mxu0 0
        %658 = vmatprep.subr.bf16.mxu0 0
        %659 = vmatpush2.bf16.msra.mxu0 0
        %660 = vmatprep.subr.bf16.mxu0 0
        %661 = vmatpush2.bf16.msra.mxu0 0
        %662 = vmatprep.subr.bf16.mxu0 0
        %663 = vmatpush2.bf16.msra.mxu0 0
        %664 = vmatprep.subr.bf16.mxu0 0
        %665 = vmatpush2.bf16.msra.mxu0 0
        %666 = vmatprep.subr.bf16.mxu0 0
        %667 = vmatpush2.bf16.msra.mxu0 0
        %668 = vmatprep.subr.bf16.mxu0 0
        %669 = vmatpush2.bf16.msra.mxu0 0
        %670 = vmatprep.mubr.bf16.mxu0 0
        %671 = vmatmul.mubr.bf16.gmra.mxu0 %v559
        %v672 = vpop.f32.mrf.mxu0
        %v673 = vadd.f32 %v588, %v672
        %v674 = vpop.f32.mrf.mxu0
        %v675 = vpop.f32.mrf.mxu0
        %v676 = vadd.f32 %v588, %v675
        %v677 = vpop.f32.mrf.mxu0
        %678 = vmatprep.mubr.bf16.mxu0 0
        %679 = vmatmul.mubr.bf16.gmra.mxu0 %v560
        %v680 = vpop.f32.mrf.mxu0
        %v681 = vadd.f32 %v588, %v680
        %v682 = vpop.f32.mrf.mxu0
        %v683 = vpop.f32.mrf.mxu0
        %v684 = vadd.f32 %v588, %v683
        %v685 = vpop.f32.mrf.mxu0
        %686 = vmatprep.mubr.bf16.mxu0 0
        %687 = vmatmul.mubr.bf16.gmra.mxu0 %v561
        %v688 = vpop.f32.mrf.mxu0
        %v689 = vadd.f32 %v588, %v688
        %v690 = vpop.f32.mrf.mxu0
        %v691 = vpop.f32.mrf.mxu0
        %v692 = vadd.f32 %v588, %v691
        %v693 = vpop.f32.mrf.mxu0
        %694 = vmatprep.mubr.bf16.mxu0 0
        %695 = vmatmul.mubr.bf16.gmra.mxu0 %v562
        %v696 = vpop.f32.mrf.mxu0
        %v697 = vadd.f32 %v588, %v696
        %v698 = vpop.f32.mrf.mxu0
        %v699 = vpop.f32.mrf.mxu0
        %v700 = vadd.f32 %v588, %v699
        %v701 = vpop.f32.mrf.mxu0
        %702 = vmatprep.mubr.bf16.mxu0 0
        %703 = vmatmul.mubr.bf16.gmra.mxu0 %v563
        %v704 = vpop.f32.mrf.mxu0
        %v705 = vadd.f32 %v588, %v704
        %v706 = vpop.f32.mrf.mxu0
        %v707 = vpop.f32.mrf.mxu0
        %v708 = vadd.f32 %v588, %v707
        %v709 = vpop.f32.mrf.mxu0
        %710 = vmatprep.mubr.bf16.mxu0 0
        %711 = vmatmul.mubr.bf16.gmra.mxu0 %v564
        %v712 = vpop.f32.mrf.mxu0
        %v713 = vadd.f32 %v588, %v712
        %v714 = vpop.f32.mrf.mxu0
        %v715 = vpop.f32.mrf.mxu0
        %v716 = vadd.f32 %v588, %v715
        %v717 = vpop.f32.mrf.mxu0
        %718 = vmatprep.mubr.bf16.mxu0 0
        %719 = vmatmul.mubr.bf16.gmra.mxu0 %v565
        %v720 = vpop.f32.mrf.mxu0
        %v721 = vadd.f32 %v588, %v720
        %v722 = vpop.f32.mrf.mxu0
        %v723 = vpop.f32.mrf.mxu0
        %v724 = vadd.f32 %v588, %v723
        %v725 = vpop.f32.mrf.mxu0
        %726 = vmatprep.mubr.bf16.mxu0 0
        %727 = vmatmul.mubr.bf16.gmra.mxu0 %v566
        %v728 = vpop.f32.mrf.mxu0
        %v729 = vadd.f32 %v588, %v728
        %v730 = vpop.f32.mrf.mxu0
        %v731 = vpop.f32.mrf.mxu0
        %v732 = vadd.f32 %v588, %v731
        %v733 = vpop.f32.mrf.mxu0
        %734 = vdwg.mxu0
        %v735 = vmax.f32 %v673, 0.0
        %v736 = vmax.f32 %v676, 0.0
        %v737 = vmax.f32 %v681, 0.0
        %v738 = vmax.f32 %v684, 0.0
        %v739 = vmax.f32 %v689, 0.0
        %v740 = vmax.f32 %v692, 0.0
        %v741 = vmax.f32 %v697, 0.0
        %v742 = vmax.f32 %v700, 0.0
        %v743 = vmax.f32 %v705, 0.0
        %v744 = vmax.f32 %v708, 0.0
        %v745 = vmax.f32 %v713, 0.0
        %v746 = vmax.f32 %v716, 0.0
        %v747 = vmax.f32 %v721, 0.0
        %v748 = vmax.f32 %v724, 0.0
        %v749 = vmax.f32 %v729, 0.0
        %v750 = vmax.f32 %v732, 0.0
        %v751 = vpack.c.bf16 %v736, %v735
        %v752 = vpack.c.bf16 %v738, %v737
        %v753 = vpack.c.bf16 %v740, %v739
        %v754 = vpack.c.bf16 %v742, %v741
        %v755 = vpack.c.bf16 %v744, %v743
        %v756 = vpack.c.bf16 %v746, %v745
        %v757 = vpack.c.bf16 %v748, %v747
        %v758 = vpack.c.bf16 %v750, %v749
        %v759 = vld [vmem:[%s5] sm:$0xf]
        %v760 = vld [vmem:[%s5 + $0x4] sm:$0xf]
        %v761 = vld [vmem:[%s5 + $0x8] sm:$0xf]
        %v762 = vld [vmem:[%s5 + $0xc] sm:$0xf]
        %v763 = vld [vmem:[%s5 + $0x10] sm:$0xf]
        %v764 = vld [vmem:[%s5 + $0x14] sm:$0xf]
        %v765 = vld [vmem:[%s5 + $0x18] sm:$0xf]
        %v766 = vld [vmem:[%s5 + $0x1c] sm:$0xf]
        %v767 = vld [vmem:[%s5 + $0x20] sm:$0xf]
        %v768 = vld [vmem:[%s5 + $0x24] sm:$0xf]
        %v769 = vld [vmem:[%s5 + $0x28] sm:$0xf]
        %v770 = vld [vmem:[%s5 + $0x2c] sm:$0xf]
        %v771 = vld [vmem:[%s5 + $0x30] sm:$0xf]
        %v772 = vld [vmem:[%s5 + $0x34] sm:$0xf]
        %v773 = vld [vmem:[%s5 + $0x38] sm:$0xf]
        %v774 = vld [vmem:[%s5 + $0x3c] sm:$0xf]
        %v775 = vld [vmem:[%s6] sm:$0x1]
        %v777 = vlaneseq
        %v778 = vshrl.u32 %v777, 7
        %v779 = vsub.s32 0, %v778
        %v780 = vrot.slane %v775, %v779
        %v798 = vunpack.c.l.b16 %v759
        %v799 = vunpack.c.l.b16 %v760
        %v800 = vunpack.c.l.b16 %v761
        %v801 = vunpack.c.l.b16 %v762
        %v802 = vunpack.c.l.b16 %v763
        %v803 = vunpack.c.l.b16 %v764
        %v804 = vunpack.c.l.b16 %v765
        %v805 = vunpack.c.l.b16 %v766
        %v806 = vunpack.c.l.b16 %v767
        %v807 = vunpack.c.l.b16 %v768
        %v808 = vunpack.c.l.b16 %v769
        %v809 = vunpack.c.l.b16 %v770
        %v810 = vunpack.c.l.b16 %v771
        %v811 = vunpack.c.l.b16 %v772
        %v812 = vunpack.c.l.b16 %v773
        %v813 = vunpack.c.l.b16 %v774
        %v814 = vpack.c.b16 %v799, %v798
        %v815 = vpack.c.b16 %v801, %v800
        %v816 = vpack.c.b16 %v803, %v802
        %v817 = vpack.c.b16 %v805, %v804
        %v818 = vpack.c.b16 %v807, %v806
        %v819 = vpack.c.b16 %v809, %v808
        %v820 = vpack.c.b16 %v811, %v810
        %v821 = vpack.c.b16 %v813, %v812
        %830 = vmatprep.subr.bf16.mxu0 0
        %831 = vmatpush1.bf16.msra.mxu0 %v821
        %832 = vmatprep.subr.bf16.mxu0 0
        %833 = vmatpush1.bf16.msra.mxu0 %v820
        %834 = vmatprep.subr.bf16.mxu0 0
        %835 = vmatpush1.bf16.msra.mxu0 %v819
        %836 = vmatprep.subr.bf16.mxu0 0
        %837 = vmatpush1.bf16.msra.mxu0 %v818
        %838 = vmatprep.subr.bf16.mxu0 0
        %839 = vmatpush1.bf16.msra.mxu0 %v817
        %840 = vmatprep.subr.bf16.mxu0 0
        %841 = vmatpush1.bf16.msra.mxu0 %v816
        %842 = vmatprep.subr.bf16.mxu0 0
        %843 = vmatpush1.bf16.msra.mxu0 %v815
        %844 = vmatprep.subr.bf16.mxu0 0
        %845 = vmatpush1.bf16.msra.mxu0 %v814
        %846 = vmatprep.subr.bf16.mxu0 0
        %847 = vmatpush2.bf16.msra.mxu0 0
        %848 = vmatprep.subr.bf16.mxu0 0
        %849 = vmatpush2.bf16.msra.mxu0 0
        %850 = vmatprep.subr.bf16.mxu0 0
        %851 = vmatpush2.bf16.msra.mxu0 0
        %852 = vmatprep.subr.bf16.mxu0 0
        %853 = vmatpush2.bf16.msra.mxu0 0
        %854 = vmatprep.subr.bf16.mxu0 0
        %855 = vmatpush2.bf16.msra.mxu0 0
        %856 = vmatprep.subr.bf16.mxu0 0
        %857 = vmatpush2.bf16.msra.mxu0 0
        %858 = vmatprep.subr.bf16.mxu0 0
        %859 = vmatpush2.bf16.msra.mxu0 0
        %860 = vmatprep.subr.bf16.mxu0 0
        %861 = vmatpush2.bf16.msra.mxu0 0
        %862 = vmatprep.mubr.bf16.mxu0 0
        %863 = vmatmul.mubr.bf16.gmra.mxu0 %v751
        %v864 = vpop.f32.mrf.mxu0
        %v865 = vadd.f32 %v780, %v864
        %v866 = vpop.f32.mrf.mxu0
        %v867 = vpop.f32.mrf.mxu0
        %v868 = vadd.f32 %v780, %v867
        %v869 = vpop.f32.mrf.mxu0
        %870 = vmatprep.mubr.bf16.mxu0 0
        %871 = vmatmul.mubr.bf16.gmra.mxu0 %v752
        %v872 = vpop.f32.mrf.mxu0
        %v873 = vadd.f32 %v780, %v872
        %v874 = vpop.f32.mrf.mxu0
        %v875 = vpop.f32.mrf.mxu0
        %v876 = vadd.f32 %v780, %v875
        %v877 = vpop.f32.mrf.mxu0
        %878 = vmatprep.mubr.bf16.mxu0 0
        %879 = vmatmul.mubr.bf16.gmra.mxu0 %v753
        %v880 = vpop.f32.mrf.mxu0
        %v881 = vadd.f32 %v780, %v880
        %v882 = vpop.f32.mrf.mxu0
        %v883 = vpop.f32.mrf.mxu0
        %v884 = vadd.f32 %v780, %v883
        %v885 = vpop.f32.mrf.mxu0
        %886 = vmatprep.mubr.bf16.mxu0 0
        %887 = vmatmul.mubr.bf16.gmra.mxu0 %v754
        %v888 = vpop.f32.mrf.mxu0
        %v889 = vadd.f32 %v780, %v888
        %v890 = vpop.f32.mrf.mxu0
        %v891 = vpop.f32.mrf.mxu0
        %v892 = vadd.f32 %v780, %v891
        %v893 = vpop.f32.mrf.mxu0
        %894 = vmatprep.mubr.bf16.mxu0 0
        %895 = vmatmul.mubr.bf16.gmra.mxu0 %v755
        %v896 = vpop.f32.mrf.mxu0
        %v897 = vadd.f32 %v780, %v896
        %v898 = vpop.f32.mrf.mxu0
        %v899 = vpop.f32.mrf.mxu0
        %v900 = vadd.f32 %v780, %v899
        %v901 = vpop.f32.mrf.mxu0
        %902 = vmatprep.mubr.bf16.mxu0 0
        %903 = vmatmul.mubr.bf16.gmra.mxu0 %v756
        %v904 = vpop.f32.mrf.mxu0
        %v905 = vadd.f32 %v780, %v904
        %v906 = vpop.f32.mrf.mxu0
        %v907 = vpop.f32.mrf.mxu0
        %v908 = vadd.f32 %v780, %v907
        %v909 = vpop.f32.mrf.mxu0
        %910 = vmatprep.mubr.bf16.mxu0 0
        %911 = vmatmul.mubr.bf16.gmra.mxu0 %v757
        %v912 = vpop.f32.mrf.mxu0
        %v913 = vadd.f32 %v780, %v912
        %v914 = vpop.f32.mrf.mxu0
        %v915 = vpop.f32.mrf.mxu0
        %v916 = vadd.f32 %v780, %v915
        %v917 = vpop.f32.mrf.mxu0
        %918 = vmatprep.mubr.bf16.mxu0 0
        %919 = vmatmul.mubr.bf16.gmra.mxu0 %v758
        %v920 = vpop.f32.mrf.mxu0
        %v921 = vadd.f32 %v780, %v920
        %v922 = vpop.f32.mrf.mxu0
        %v923 = vpop.f32.mrf.mxu0
        %v924 = vadd.f32 %v780, %v923
        %v925 = vpop.f32.mrf.mxu0
        %926 = vdwg.mxu0
        %v927 = vmax.f32 %v865, 0.0
        %v928 = vmax.f32 %v868, 0.0
        %v929 = vmax.f32 %v873, 0.0
        %v930 = vmax.f32 %v876, 0.0
        %v931 = vmax.f32 %v881, 0.0
        %v932 = vmax.f32 %v884, 0.0
        %v933 = vmax.f32 %v889, 0.0
        %v934 = vmax.f32 %v892, 0.0
        %v935 = vmax.f32 %v897, 0.0
        %v936 = vmax.f32 %v900, 0.0
        %v937 = vmax.f32 %v905, 0.0
        %v938 = vmax.f32 %v908, 0.0
        %v939 = vmax.f32 %v913, 0.0
        %v940 = vmax.f32 %v916, 0.0
        %v941 = vmax.f32 %v921, 0.0
        %v942 = vmax.f32 %v924, 0.0
        %v943 = vpack.c.bf16 %v928, %v927
        %v944 = vpack.c.bf16 %v930, %v929
        %v945 = vpack.c.bf16 %v932, %v931
        %v946 = vpack.c.bf16 %v934, %v933
        %v947 = vpack.c.bf16 %v936, %v935
        %v948 = vpack.c.bf16 %v938, %v937
        %v949 = vpack.c.bf16 %v940, %v939
        %v950 = vpack.c.bf16 %v942, %v941
        %v951 = vld [vmem:[#allocation2] sm:$0xf]
        %v952 = vld [vmem:[#allocation2 + $0x4] sm:$0xf]
        %v953 = vld [vmem:[#allocation2 + $0x8] sm:$0xf]
        %v954 = vld [vmem:[#allocation2 + $0xc] sm:$0xf]
        %v955 = vld [vmem:[#allocation2 + $0x10] sm:$0xf]
        %v956 = vld [vmem:[#allocation2 + $0x14] sm:$0xf]
        %v957 = vld [vmem:[#allocation2 + $0x18] sm:$0xf]
        %v958 = vld [vmem:[#allocation2 + $0x1c] sm:$0xf]
        %v959 = vld [vmem:[#allocation2 + $0x20] sm:$0xf]
        %v960 = vld [vmem:[#allocation2 + $0x24] sm:$0xf]
        %v961 = vld [vmem:[#allocation2 + $0x28] sm:$0xf]
        %v962 = vld [vmem:[#allocation2 + $0x2c] sm:$0xf]
        %v963 = vld [vmem:[#allocation2 + $0x30] sm:$0xf]
        %v964 = vld [vmem:[#allocation2 + $0x34] sm:$0xf]
        %v965 = vld [vmem:[#allocation2 + $0x38] sm:$0xf]
        %v966 = vld [vmem:[#allocation2 + $0x3c] sm:$0xf]
        %v967 = vld [vmem:[%s8] sm:$0x1]
        %v969 = vlaneseq
        %v970 = vshrl.u32 %v969, 7
        %v971 = vsub.s32 0, %v970
        %v972 = vrot.slane %v967, %v971
        %v990 = vunpack.c.l.b16 %v951
        %v991 = vunpack.c.l.b16 %v952
        %v992 = vunpack.c.l.b16 %v953
        %v993 = vunpack.c.l.b16 %v954
        %v994 = vunpack.c.l.b16 %v955
        %v995 = vunpack.c.l.b16 %v956
        %v996 = vunpack.c.l.b16 %v957
        %v997 = vunpack.c.l.b16 %v958
        %v998 = vunpack.c.l.b16 %v959
        %v999 = vunpack.c.l.b16 %v960
        %v1000 = vunpack.c.l.b16 %v961
        %v1001 = vunpack.c.l.b16 %v962
        %v1002 = vunpack.c.l.b16 %v963
        %v1003 = vunpack.c.l.b16 %v964
        %v1004 = vunpack.c.l.b16 %v965
        %v1005 = vunpack.c.l.b16 %v966
        %v1006 = vpack.c.b16 %v991, %v990
        %v1007 = vpack.c.b16 %v993, %v992
        %v1008 = vpack.c.b16 %v995, %v994
        %v1009 = vpack.c.b16 %v997, %v996
        %v1010 = vpack.c.b16 %v999, %v998
        %v1011 = vpack.c.b16 %v1001, %v1000
        %v1012 = vpack.c.b16 %v1003, %v1002
        %v1013 = vpack.c.b16 %v1005, %v1004
        %1022 = vmatprep.subr.bf16.mxu0 0
        %1023 = vmatpush1.bf16.msra.mxu0 %v1013
        %1024 = vmatprep.subr.bf16.mxu0 0
        %1025 = vmatpush1.bf16.msra.mxu0 %v1012
        %1026 = vmatprep.subr.bf16.mxu0 0
        %1027 = vmatpush1.bf16.msra.mxu0 %v1011
        %1028 = vmatprep.subr.bf16.mxu0 0
        %1029 = vmatpush1.bf16.msra.mxu0 %v1010
        %1030 = vmatprep.subr.bf16.mxu0 0
        %1031 = vmatpush1.bf16.msra.mxu0 %v1009
        %1032 = vmatprep.subr.bf16.mxu0 0
        %1033 = vmatpush1.bf16.msra.mxu0 %v1008
        %1034 = vmatprep.subr.bf16.mxu0 0
        %1035 = vmatpush1.bf16.msra.mxu0 %v1007
        %1036 = vmatprep.subr.bf16.mxu0 0
        %1037 = vmatpush1.bf16.msra.mxu0 %v1006
        %1038 = vmatprep.subr.bf16.mxu0 0
        %1039 = vmatpush2.bf16.msra.mxu0 0
        %1040 = vmatprep.subr.bf16.mxu0 0
        %1041 = vmatpush2.bf16.msra.mxu0 0
        %1042 = vmatprep.subr.bf16.mxu0 0
        %1043 = vmatpush2.bf16.msra.mxu0 0
        %1044 = vmatprep.subr.bf16.mxu0 0
        %1045 = vmatpush2.bf16.msra.mxu0 0
        %1046 = vmatprep.subr.bf16.mxu0 0
        %1047 = vmatpush2.bf16.msra.mxu0 0
        %1048 = vmatprep.subr.bf16.mxu0 0
        %1049 = vmatpush2.bf16.msra.mxu0 0
        %1050 = vmatprep.subr.bf16.mxu0 0
        %1051 = vmatpush2.bf16.msra.mxu0 0
        %1052 = vmatprep.subr.bf16.mxu0 0
        %1053 = vmatpush2.bf16.msra.mxu0 0
        %1054 = vmatprep.mubr.bf16.mxu0 0
        %1055 = vmatmul.mubr.bf16.gmra.mxu0 %v943
        %v1056 = vpop.f32.mrf.mxu0
        %v1057 = vadd.f32 %v972, %v1056
        %v1058 = vpop.f32.mrf.mxu0
        %v1059 = vpop.f32.mrf.mxu0
        %v1060 = vadd.f32 %v972, %v1059
        %v1061 = vpop.f32.mrf.mxu0
        %1062 = vmatprep.mubr.bf16.mxu0 0
        %1063 = vmatmul.mubr.bf16.gmra.mxu0 %v944
        %v1064 = vpop.f32.mrf.mxu0
        %v1065 = vadd.f32 %v972, %v1064
        %v1066 = vpop.f32.mrf.mxu0
        %v1067 = vpop.f32.mrf.mxu0
        %v1068 = vadd.f32 %v972, %v1067
        %v1069 = vpop.f32.mrf.mxu0
        %1070 = vmatprep.mubr.bf16.mxu0 0
        %1071 = vmatmul.mubr.bf16.gmra.mxu0 %v945
        %v1072 = vpop.f32.mrf.mxu0
        %v1073 = vadd.f32 %v972, %v1072
        %v1074 = vpop.f32.mrf.mxu0
        %v1075 = vpop.f32.mrf.mxu0
        %v1076 = vadd.f32 %v972, %v1075
        %v1077 = vpop.f32.mrf.mxu0
        %1078 = vmatprep.mubr.bf16.mxu0 0
        %1079 = vmatmul.mubr.bf16.gmra.mxu0 %v946
        %v1080 = vpop.f32.mrf.mxu0
        %v1081 = vadd.f32 %v972, %v1080
        %v1082 = vpop.f32.mrf.mxu0
        %v1083 = vpop.f32.mrf.mxu0
        %v1084 = vadd.f32 %v972, %v1083
        %v1085 = vpop.f32.mrf.mxu0
        %1086 = vmatprep.mubr.bf16.mxu0 0
        %1087 = vmatmul.mubr.bf16.gmra.mxu0 %v947
        %v1088 = vpop.f32.mrf.mxu0
        %v1089 = vadd.f32 %v972, %v1088
        %v1090 = vpop.f32.mrf.mxu0
        %v1091 = vpop.f32.mrf.mxu0
        %v1092 = vadd.f32 %v972, %v1091
        %v1093 = vpop.f32.mrf.mxu0
        %1094 = vmatprep.mubr.bf16.mxu0 0
        %1095 = vmatmul.mubr.bf16.gmra.mxu0 %v948
        %v1096 = vpop.f32.mrf.mxu0
        %v1097 = vadd.f32 %v972, %v1096
        %v1098 = vpop.f32.mrf.mxu0
        %v1099 = vpop.f32.mrf.mxu0
        %v1100 = vadd.f32 %v972, %v1099
        %v1101 = vpop.f32.mrf.mxu0
        %1102 = vmatprep.mubr.bf16.mxu0 0
        %1103 = vmatmul.mubr.bf16.gmra.mxu0 %v949
        %v1104 = vpop.f32.mrf.mxu0
        %v1105 = vadd.f32 %v972, %v1104
        %v1106 = vpop.f32.mrf.mxu0
        %v1107 = vpop.f32.mrf.mxu0
        %v1108 = vadd.f32 %v972, %v1107
        %v1109 = vpop.f32.mrf.mxu0
        %1110 = vmatprep.mubr.bf16.mxu0 0
        %1111 = vmatmul.mubr.bf16.gmra.mxu0 %v950
        %v1112 = vpop.f32.mrf.mxu0
        %v1113 = vadd.f32 %v972, %v1112
        %v1114 = vpop.f32.mrf.mxu0
        %v1115 = vpop.f32.mrf.mxu0
        %v1116 = vadd.f32 %v972, %v1115
        %v1117 = vpop.f32.mrf.mxu0
        %1118 = vdwg.mxu0
        %v1119 = vlaneseq
        %v1120 = vand.u32 %v1119, 127
        %vm1121 = vcmp.lt.s32.totalorder %v1120, 8
        %v1122 = vsel %vm1121, %v1057, 0.0
        %v1123 = vsel %vm1121, %v1060, 0.0
        %v1124 = vsel %vm1121, %v1065, 0.0
        %v1125 = vsel %vm1121, %v1068, 0.0
        %v1126 = vsel %vm1121, %v1073, 0.0
        %v1127 = vsel %vm1121, %v1076, 0.0
        %v1128 = vsel %vm1121, %v1081, 0.0
        %v1129 = vsel %vm1121, %v1084, 0.0
        %v1130 = vsel %vm1121, %v1089, 0.0
        %v1131 = vsel %vm1121, %v1092, 0.0
        %v1132 = vsel %vm1121, %v1097, 0.0
        %v1133 = vsel %vm1121, %v1100, 0.0
        %v1134 = vsel %vm1121, %v1105, 0.0
        %v1135 = vsel %vm1121, %v1108, 0.0
        %v1136 = vsel %vm1121, %v1113, 0.0
        %v1137 = vsel %vm1121, %v1116, 0.0
        %1138 = vadd.xlane.f32.xlu0 %v1122
        %v1139 = vpop.xlane.xlu0 %1138
        %1140 = vadd.xlane.f32.xlu0 %v1123
        %v1141 = vpop.xlane.xlu0 %1140
        %1142 = vadd.xlane.f32.xlu0 %v1124
        %v1143 = vpop.xlane.xlu0 %1142
        %1144 = vadd.xlane.f32.xlu0 %v1125
        %v1145 = vpop.xlane.xlu0 %1144
        %1146 = vadd.xlane.f32.xlu0 %v1126
        %v1147 = vpop.xlane.xlu0 %1146
        %1148 = vadd.xlane.f32.xlu0 %v1127
        %v1149 = vpop.xlane.xlu0 %1148
        %1150 = vadd.xlane.f32.xlu0 %v1128
        %v1151 = vpop.xlane.xlu0 %1150
        %1152 = vadd.xlane.f32.xlu0 %v1129
        %v1153 = vpop.xlane.xlu0 %1152
        %1154 = vadd.xlane.f32.xlu0 %v1130
        %v1155 = vpop.xlane.xlu0 %1154
        %1156 = vadd.xlane.f32.xlu0 %v1131
        %v1157 = vpop.xlane.xlu0 %1156
        %1158 = vadd.xlane.f32.xlu0 %v1132
        %v1159 = vpop.xlane.xlu0 %1158
        %1160 = vadd.xlane.f32.xlu0 %v1133
        %v1161 = vpop.xlane.xlu0 %1160
        %1162 = vadd.xlane.f32.xlu0 %v1134
        %v1163 = vpop.xlane.xlu0 %1162
        %1164 = vadd.xlane.f32.xlu0 %v1135
        %v1165 = vpop.xlane.xlu0 %1164
        %1166 = vadd.xlane.f32.xlu0 %v1136
        %v1167 = vpop.xlane.xlu0 %1166
        %1168 = vadd.xlane.f32.xlu0 %v1137
        %v1169 = vpop.xlane.xlu0 %1168
        %vm1170 = vcmp.eq.s32.totalorder %v1120, 8
        %v1171 = vsel %vm1170, %v1057, 0.0
        %v1172 = vsel %vm1170, %v1060, 0.0
        %v1173 = vsel %vm1170, %v1065, 0.0
        %v1174 = vsel %vm1170, %v1068, 0.0
        %v1175 = vsel %vm1170, %v1073, 0.0
        %v1176 = vsel %vm1170, %v1076, 0.0
        %v1177 = vsel %vm1170, %v1081, 0.0
        %v1178 = vsel %vm1170, %v1084, 0.0
        %v1179 = vsel %vm1170, %v1089, 0.0
        %v1180 = vsel %vm1170, %v1092, 0.0
        %v1181 = vsel %vm1170, %v1097, 0.0
        %v1182 = vsel %vm1170, %v1100, 0.0
        %v1183 = vsel %vm1170, %v1105, 0.0
        %v1184 = vsel %vm1170, %v1108, 0.0
        %v1185 = vsel %vm1170, %v1113, 0.0
        %v1186 = vsel %vm1170, %v1116, 0.0
        %1187 = vadd.xlane.f32.xlu0 %v1171
        %v1188 = vpop.xlane.xlu0 %1187
        %1189 = vadd.xlane.f32.xlu0 %v1172
        %v1190 = vpop.xlane.xlu0 %1189
        %1191 = vadd.xlane.f32.xlu0 %v1173
        %v1192 = vpop.xlane.xlu0 %1191
        %1193 = vadd.xlane.f32.xlu0 %v1174
        %v1194 = vpop.xlane.xlu0 %1193
        %1195 = vadd.xlane.f32.xlu0 %v1175
        %v1196 = vpop.xlane.xlu0 %1195
        %1197 = vadd.xlane.f32.xlu0 %v1176
        %v1198 = vpop.xlane.xlu0 %1197
        %1199 = vadd.xlane.f32.xlu0 %v1177
        %v1200 = vpop.xlane.xlu0 %1199
        %1201 = vadd.xlane.f32.xlu0 %v1178
        %v1202 = vpop.xlane.xlu0 %1201
        %1203 = vadd.xlane.f32.xlu0 %v1179
        %v1204 = vpop.xlane.xlu0 %1203
        %1205 = vadd.xlane.f32.xlu0 %v1180
        %v1206 = vpop.xlane.xlu0 %1205
        %1207 = vadd.xlane.f32.xlu0 %v1181
        %v1208 = vpop.xlane.xlu0 %1207
        %1209 = vadd.xlane.f32.xlu0 %v1182
        %v1210 = vpop.xlane.xlu0 %1209
        %1211 = vadd.xlane.f32.xlu0 %v1183
        %v1212 = vpop.xlane.xlu0 %1211
        %1213 = vadd.xlane.f32.xlu0 %v1184
        %v1214 = vpop.xlane.xlu0 %1213
        %1215 = vadd.xlane.f32.xlu0 %v1185
        %v1216 = vpop.xlane.xlu0 %1215
        %1217 = vadd.xlane.f32.xlu0 %v1186
        %v1218 = vpop.xlane.xlu0 %1217
        %v1219 = vmul.f32 %v1139, 0.125
        %v1220 = vmul.f32 %v1141, 0.125
        %v1221 = vmul.f32 %v1143, 0.125
        %v1222 = vmul.f32 %v1145, 0.125
        %v1223 = vmul.f32 %v1147, 0.125
        %v1224 = vmul.f32 %v1149, 0.125
        %v1225 = vmul.f32 %v1151, 0.125
        %v1226 = vmul.f32 %v1153, 0.125
        %v1227 = vmul.f32 %v1155, 0.125
        %v1228 = vmul.f32 %v1157, 0.125
        %v1229 = vmul.f32 %v1159, 0.125
        %v1230 = vmul.f32 %v1161, 0.125
        %v1231 = vmul.f32 %v1163, 0.125
        %v1232 = vmul.f32 %v1165, 0.125
        %v1233 = vmul.f32 %v1167, 0.125
        %v1234 = vmul.f32 %v1169, 0.125
        %v1235 = vsub.f32 %v1057, %v1219
        %v1236 = vsub.f32 %v1060, %v1220
        %v1237 = vsub.f32 %v1065, %v1221
        %v1238 = vsub.f32 %v1068, %v1222
        %v1239 = vsub.f32 %v1073, %v1223
        %v1240 = vsub.f32 %v1076, %v1224
        %v1241 = vsub.f32 %v1081, %v1225
        %v1242 = vsub.f32 %v1084, %v1226
        %v1243 = vsub.f32 %v1089, %v1227
        %v1244 = vsub.f32 %v1092, %v1228
        %v1245 = vsub.f32 %v1097, %v1229
        %v1246 = vsub.f32 %v1100, %v1230
        %v1247 = vsub.f32 %v1105, %v1231
        %v1248 = vsub.f32 %v1108, %v1232
        %v1249 = vsub.f32 %v1113, %v1233
        %v1250 = vsub.f32 %v1116, %v1234
        %v1251 = vadd.f32 %v1188, %v1235
        %v1252 = vadd.f32 %v1190, %v1236
        %v1253 = vadd.f32 %v1192, %v1237
        %v1254 = vadd.f32 %v1194, %v1238
        %v1255 = vadd.f32 %v1196, %v1239
        %v1256 = vadd.f32 %v1198, %v1240
        %v1257 = vadd.f32 %v1200, %v1241
        %v1258 = vadd.f32 %v1202, %v1242
        %v1259 = vadd.f32 %v1204, %v1243
        %v1260 = vadd.f32 %v1206, %v1244
        %v1261 = vadd.f32 %v1208, %v1245
        %v1262 = vadd.f32 %v1210, %v1246
        %v1263 = vadd.f32 %v1212, %v1247
        %v1264 = vadd.f32 %v1214, %v1248
        %v1265 = vadd.f32 %v1216, %v1249
        %v1266 = vadd.f32 %v1218, %v1250
        %1267 = vst [vmem:[%s341] sm:$0xff] %v1251
        %1268 = vst [vmem:[%s341 + $0x8] sm:$0xff] %v1252
        %1269 = vst [vmem:[%s341 + $0x10] sm:$0xff] %v1253
        %1270 = vst [vmem:[%s341 + $0x18] sm:$0xff] %v1254
        %1271 = vst [vmem:[%s341 + $0x20] sm:$0xff] %v1255
        %1272 = vst [vmem:[%s341 + $0x28] sm:$0xff] %v1256
        %1273 = vst [vmem:[%s341 + $0x30] sm:$0xff] %v1257
        %1274 = vst [vmem:[%s341 + $0x38] sm:$0xff] %v1258
        %1275 = vst [vmem:[%s341 + $0x40] sm:$0xff] %v1259
        %1276 = vst [vmem:[%s341 + $0x48] sm:$0xff] %v1260
        %1277 = vst [vmem:[%s341 + $0x50] sm:$0xff] %v1261
        %1278 = vst [vmem:[%s341 + $0x58] sm:$0xff] %v1262
        %1279 = vst [vmem:[%s341 + $0x60] sm:$0xff] %v1263
        %1280 = vst [vmem:[%s341 + $0x68] sm:$0xff] %v1264
        %1281 = vst [vmem:[%s341 + $0x70] sm:$0xff] %v1265
        %1282 = vst [vmem:[%s341 + $0x78] sm:$0xff] %v1266
        %s1283 = sand.u32 %s226, 1
        %s1284 = scalar_lea.sflag [#allocation4], %s1283
        %s1285 = sand.u32 %s226, 1
        %s1286 = smul.addr %s1285, 128
        %s1287 = scalar_lea.vmem [#allocation5], %s1286
        // Predicated region
        $region61: #{tpu_custom_call.1} parent=55 // pred_check
          %p1288 = pneg %p236
        $region62: #{tpu_custom_call.1} parent=55 // pred_check_branch
          %1290 = sbr.rel (%p1288) target = $region64
        $region63: #{tpu_custom_call.1} parent=55 // pred_region
          %s1291 = smul.u32 16, %s24
          %s1293 = ssub.s32 2048, 2048
          %1294 = vsyncadd %s1284, %s1293
          %s1295 = smul.addr %s1291, 128
          %s1296 = scalar_lea.hbm %s9, %s1295
          %s1297 = sshll.u32 %s1287, 4
          %s1298 = int_to_ptr.vmem [resolvable:$true] %s1297
          %1303 = dma.vmem_to_hbm [thread:$0]  %s1298, 2048, %s1296, %s1284, 128, 128, 8
        $region64: #{tpu_custom_call.1} parent=55 // pred_fallthru
          _
      $region56: #{tpu_custom_call.1} parent=5 // pred_fallthru
        _
      %p1304 = scmp.le.s32.totalorder 2, %s19
      // Predicated region
      $region65: #{tpu_custom_call.1} parent=5 // pred_check
        %p1305 = pneg %p1304
      $region66: #{tpu_custom_call.1} parent=5 // pred_check_branch
        %1307 = sbr.rel (%p1305) target = $region68
      $region67: #{tpu_custom_call.1} parent=5 // pred_region
        %s1308 = ssub.s32 %s19, 2
        // Predicated region
        $region69: #{tpu_custom_call.1} parent=67 // pred_check
          %p1309 = pneg %p242
        $region70: #{tpu_custom_call.1} parent=67 // pred_check_branch
          %1311 = sbr.rel (%p1309) target = $region72
        $region71: #{tpu_custom_call.1} parent=67 // pred_region
          %s1312 = sand.u32 %s227, 1
          %s1313 = scalar_lea.sflag [#allocation4], %s1312
          %s1314 = sand.u32 %s227, 1
          %s1315 = smul.addr %s1314, 128
          %s1316 = scalar_lea.vmem [#allocation5], %s1315
          %1317 = dma.done %s1313, 2048
        $region72: #{tpu_custom_call.1} parent=67 // pred_fallthru
          _
      $region68: #{tpu_custom_call.1} parent=5 // pred_fallthru
        _
    $region6: #{tpu_custom_call.1} parent=1 // loop_footer
      %s23 = sadd.s32 1, %s19
    $region7: #{tpu_custom_call.1} parent=1 // loop_footer_branch
      %18 = sbr.rel target = $region3
    $region8: #{tpu_custom_call.1} parent=1 // loop_exit
      _
    %1318 = vsyncpa [#allocation3], 1
    %s1319 = scalar_lea.sflag [#allocation3], 1
    %1320 = vsyncpa %s1319, 1
    %1321 = vsyncpa [#allocation4], 1
    %s1322 = scalar_lea.sflag [#allocation4], 1
    %1323 = vsyncpa %s1322, 1

</llo_original>
